<compile_context>
chip_gen: v7x
topology: tpu7x:2x2x1
jax: 0.10.0
libtpu: 0.0.40
codegen_flags: <defaults>
</compile_context>

<pallas_src>
import jax
import jax.numpy as jnp
from jax.experimental import pallas as pl
from jax.experimental.pallas import tpu as pltpu


def _round_up(n, m):
    return ((n + m - 1) // m) * m


def lstm_fc_kernel(xa_ref, w_ref, fc_ref, out_ref):
    # xa_ref: (T*Bp, FP) time-major; column F holds ones (folds the bias in),
    #         remaining pad columns multiply zero weight rows.
    # w_ref:  (FP + H, 8H) packed weight slab (see module docstring).
    # fc_ref: (2H + 1, 2) packed fc slab.
    xa = xa_ref[...]
    w = w_ref[...]
    TBp, FP = xa.shape
    Bp = out_ref.shape[0]
    T = TBp // Bp
    H4 = w.shape[1] // 2                    # 4H
    H = H4 // 4

    w_proj = w[:FP, :]                      # (FP, 8H)   sublane-aligned view
    whh_f = w[FP:, :H4]                     # (H, 4H)    sublane/lane-aligned view

    # Hoisted input projection for BOTH directions (+ bias via ones column):
    # one MXU dispatch before the recurrence.
    gates_x = jnp.dot(xa, w_proj, preferred_element_type=jnp.float32)  # (T*Bp, 8H)

    def gate_math(g):                       # g: (Bp, 4H), gate order [i, f, o, g]
        # sigmoid(z) = 0.5 * tanh(0.5 z) + 0.5  -> one EUP push for all 3 sigmoids
        sig = 0.5 * jnp.tanh(0.5 * g[:, :3 * H]) + 0.5
        return sig[:, :H], sig[:, H:2 * H], sig[:, 2 * H:], jnp.tanh(g[:, 3 * H:])

    # Forward recurrence, statically unrolled (T is small -> good LLO visibility).
    h = jnp.zeros((Bp, H), jnp.float32)
    c = jnp.zeros((Bp, H), jnp.float32)
    for t in range(T):
        g = gates_x[t * Bp:(t + 1) * Bp, :H4] + jnp.dot(
            h, whh_f, preferred_element_type=jnp.float32)              # (Bp, 4H)
        i, f, o, gg = gate_math(g)
        c = f * c + i * gg
        h = o * jnp.tanh(c)
    h_fwd = h                                                          # (Bp, H)

    # Reverse direction output at position T-1 == its first step from zero
    # state (model only reads lstm_out[:, -1, :]); recurrent matmul and f*c
    # terms vanish, f gate unused.
    i_b, _f_b, o_b, gg_b = gate_math(gates_x[(T - 1) * Bp:, H4:])
    h_bwd = o_b * jnp.tanh(i_b * gg_b)                                  # (Bp, H)

    # FC head without a lane-axis concat: split-weight matmuls on the packed slab.
    fc = fc_ref[...]
    out = (jnp.dot(h_fwd, fc[:H, :], preferred_element_type=jnp.float32)
           + jnp.dot(h_bwd, fc[H:2 * H, :], preferred_element_type=jnp.float32)
           + fc[2 * H:, :])
    out_ref[...] = out.astype(out_ref.dtype)


def _permute_gates(w, axis):
    """PyTorch gate order [i, f, g, o] -> kernel order [i, f, o, g]."""
    i, f, g, o = jnp.split(w, 4, axis=axis)
    return jnp.concatenate([i, f, o, g], axis=axis)


def prepare_params(params):
    """One-time weight packing (do this at model-load time, not per call)."""
    H = params["whh_f"].shape[1]
    F = params["wih_f"].shape[1]
    FP = max(8, _round_up(F + 1, 8))        # feature dim incl. bias column, 8-aligned

    wih_f = _permute_gates(params["wih_f"].T, axis=-1)                  # (F, 4H)
    wih_b = _permute_gates(params["wih_b"].T, axis=-1)                  # (F, 4H)
    b_f = _permute_gates((params["bih_f"] + params["bhh_f"])[None, :], -1)
    b_b = _permute_gates((params["bih_b"] + params["bhh_b"])[None, :], -1)
    whh_f = _permute_gates(params["whh_f"].T, axis=-1)                  # (H, 4H)
    # whh_b is never shipped: the reverse step starts from h0 = c0 = 0.

    proj = jnp.concatenate(
        [jnp.concatenate([wih_f, wih_b], axis=1),
         jnp.concatenate([b_f, b_b], axis=1)], axis=0)                  # (F+1, 8H)
    proj = jnp.pad(proj, ((0, FP - (F + 1)), (0, 0)))                   # (FP, 8H)
    rec = jnp.pad(whh_f, ((0, 0), (0, 4 * H)))                          # (H, 8H)
    w_slab = jnp.concatenate([proj, rec], axis=0).astype(jnp.float32)   # (FP+H, 8H)

    wfc = params["wfc"].T                                               # (2H, 2)
    fc_slab = jnp.concatenate([wfc, params["bfc"][None, :]],
                              axis=0).astype(jnp.float32)               # (2H+1, 2)

    return {"w_slab": w_slab, "fc_slab": fc_slab, "F": F, "H": H, "FP": FP}


def my_rnn_forward(x, prep):
    """x: (B, T, F) float32 -> (B, 2) float32."""
    B, T, F = x.shape
    FP = prep["FP"]
    Bp = max(8, _round_up(B, 8))            # pad batch to a full sublane group

    # time-major + pad: constant 1.0 fills the bias column (col F), the extra
    # feature pad columns hit zero weight rows, and batch pad rows are stripped.
    x_aug = jnp.pad(jnp.transpose(x, (1, 0, 2)),
                    ((0, 0), (0, Bp - B), (0, FP - F)),
                    constant_values=1.0).reshape(T * Bp, FP)

    vmem = pl.BlockSpec(memory_space=pltpu.MemorySpace.VMEM)
    out = pl.pallas_call(
        lstm_fc_kernel,
        out_shape=jax.ShapeDtypeStruct((Bp, 2), jnp.float32),
        in_specs=[vmem, vmem, vmem],
        out_specs=vmem,
    )(x_aug, prep["w_slab"], prep["fc_slab"])
    return out[:B]                           # strip batch pad rows


# ---------------- pure-JAX reference (PyTorch LSTM semantics) ----------------
def _lstm_dir_ref(x, wih, whh, bih, bhh):
    B, T, F = x.shape
    H = whh.shape[1]
    h = jnp.zeros((B, H), jnp.float32)
    c = jnp.zeros((B, H), jnp.float32)
    outs = []
    for t in range(T):
        g = x[:, t] @ wih.T + bih + h @ whh.T + bhh
        i, f, gg, o = jnp.split(g, 4, axis=-1)
        i = jax.nn.sigmoid(i)
        f = jax.nn.sigmoid(f)
        gg = jnp.tanh(gg)
        o = jax.nn.sigmoid(o)
        c = f * c + i * gg
        h = o * jnp.tanh(c)
        outs.append(h)
    return jnp.stack(outs, axis=1)                              # (B, T, H)


def my_rnn_forward_ref(x, p):
    out_f = _lstm_dir_ref(x, p["wih_f"], p["whh_f"], p["bih_f"], p["bhh_f"])
    out_b = _lstm_dir_ref(x[:, ::-1], p["wih_b"], p["whh_b"],
                          p["bih_b"], p["bhh_b"])[:, ::-1]
    lstm_out = jnp.concatenate([out_f, out_b], axis=-1)         # (B, T, 2H)
    last = lstm_out[:, -1, :]
    return last @ p["wfc"].T + p["bfc"]


def init_params(key, F, H):
    k = 1.0 / jnp.sqrt(jnp.float32(H))
    keys = jax.random.split(key, 10)
    u = lambda kk, shape: jax.random.uniform(kk, shape, jnp.float32, -k, k)
    return {
        "wih_f": u(keys[0], (4 * H, F)),
        "whh_f": u(keys[1], (4 * H, H)),
        "bih_f": u(keys[2], (4 * H,)),
        "bhh_f": u(keys[3], (4 * H,)),
        "wih_b": u(keys[4], (4 * H, F)),
        "whh_b": u(keys[5], (4 * H, H)),
        "bih_b": u(keys[6], (4 * H,)),
        "bhh_b": u(keys[7], (4 * H,)),
        "wfc": u(keys[8], (2, 2 * H)),
        "bfc": u(keys[9], (2,)),
    }


if __name__ == "__main__":
    B, T, F, H = 2, 8, 4, 32  # batch, seq, features_size, hidden_size
    key = jax.random.PRNGKey(0)
    kx, kp = jax.random.split(key)
    x = jax.random.normal(kx, (B, T, F), jnp.float32)
    params = init_params(kp, F, H)

    prep = prepare_params(params)           # one-time weight packing
    y = my_rnn_forward(x, prep)
    y = jax.block_until_ready(y)

    y_ref = my_rnn_forward_ref(x, params)
    assert y.shape == (B, 2)
    assert jnp.allclose(y, y_ref, atol=1e-5, rtol=1e-5), (y, y_ref)

    print("KERNEL_OK")
</pallas_src>

<mosaic_0001>
module attributes {stable_mosaic.version = 11 : i64} {
  func.func @lstm_fc_kernel(%arg0: memref<64x8xf32, #tpu.memory_space<vmem>>, %arg1: memref<40x256xf32, #tpu.memory_space<vmem>>, %arg2: memref<65x2xf32, #tpu.memory_space<vmem>>, %arg3: memref<8x2xf32, #tpu.memory_space<vmem>>) attributes {dimension_semantics = [], scalar_prefetch = 0 : i64, scratch_operands = 0 : i64, tpu.core_type = #tpu.core_type<tc>} {
    %c0 = arith.constant 0 : index
    %c0_0 = arith.constant 0 : index
    %0 = vector.load %arg0[%c0, %c0_0] : memref<64x8xf32, #tpu.memory_space<vmem>>, vector<64x8xf32>
    %c0_1 = arith.constant 0 : index
    %c0_2 = arith.constant 0 : index
    %1 = vector.load %arg1[%c0_1, %c0_2] : memref<40x256xf32, #tpu.memory_space<vmem>>, vector<40x256xf32>
    %2 = vector.extract_strided_slice %1 {offsets = [0, 0], sizes = [8, 256], strides = [1, 1]} : vector<40x256xf32> to vector<8x256xf32>
    %3 = vector.extract_strided_slice %1 {offsets = [8, 0], sizes = [32, 128], strides = [1, 1]} : vector<40x256xf32> to vector<32x128xf32>
    %cst = arith.constant dense<0.000000e+00> : vector<64x256xf32>
    %4 = tpu.matmul %0, %2, %cst {dimension_numbers = #tpu.dot_dimension_numbers<[1], [0], [0], [1], [0, 0, 1, 1], [], []>} : vector<64x8xf32>, vector<8x256xf32>, vector<64x256xf32> -> vector<64x256xf32>
    %cst_3 = arith.constant 0.000000e+00 : f32
    %5 = vector.broadcast %cst_3 : f32 to vector<8x32xf32>
    %cst_4 = arith.constant 0.000000e+00 : f32
    %6 = vector.broadcast %cst_4 : f32 to vector<8x32xf32>
    %7 = vector.extract_strided_slice %4 {offsets = [0, 0], sizes = [8, 128], strides = [1, 1]} : vector<64x256xf32> to vector<8x128xf32>
    %cst_5 = arith.constant dense<0.000000e+00> : vector<8x128xf32>
    %8 = tpu.matmul %5, %3, %cst_5 {dimension_numbers = #tpu.dot_dimension_numbers<[1], [0], [0], [1], [0, 0, 1, 1], [], []>} : vector<8x32xf32>, vector<32x128xf32>, vector<8x128xf32> -> vector<8x128xf32>
    %9 = arith.addf %7, %8 : vector<8x128xf32>
    %10 = vector.extract_strided_slice %9 {offsets = [0, 0], sizes = [8, 96], strides = [1, 1]} : vector<8x128xf32> to vector<8x96xf32>
    %cst_6 = arith.constant 5.000000e-01 : f32
    %11 = vector.broadcast %cst_6 : f32 to vector<8x96xf32>
    %12 = arith.mulf %11, %10 : vector<8x96xf32>
    %13 = math.tanh %12 : vector<8x96xf32>
    %cst_7 = arith.constant 5.000000e-01 : f32
    %14 = vector.broadcast %cst_7 : f32 to vector<8x96xf32>
    %15 = arith.mulf %14, %13 : vector<8x96xf32>
    %cst_8 = arith.constant 5.000000e-01 : f32
    %16 = vector.broadcast %cst_8 : f32 to vector<8x96xf32>
    %17 = arith.addf %15, %16 : vector<8x96xf32>
    %18 = vector.extract_strided_slice %17 {offsets = [0, 0], sizes = [8, 32], strides = [1, 1]} : vector<8x96xf32> to vector<8x32xf32>
    %19 = vector.extract_strided_slice %17 {offsets = [0, 32], sizes = [8, 32], strides = [1, 1]} : vector<8x96xf32> to vector<8x32xf32>
    %20 = vector.extract_strided_slice %17 {offsets = [0, 64], sizes = [8, 32], strides = [1, 1]} : vector<8x96xf32> to vector<8x32xf32>
    %21 = vector.extract_strided_slice %9 {offsets = [0, 96], sizes = [8, 32], strides = [1, 1]} : vector<8x128xf32> to vector<8x32xf32>
    %22 = math.tanh %21 : vector<8x32xf32>
    %23 = arith.mulf %19, %6 : vector<8x32xf32>
    %24 = arith.mulf %18, %22 : vector<8x32xf32>
    %25 = arith.addf %23, %24 : vector<8x32xf32>
    %26 = math.tanh %25 : vector<8x32xf32>
    %27 = arith.mulf %20, %26 : vector<8x32xf32>
    %28 = vector.extract_strided_slice %4 {offsets = [8, 0], sizes = [8, 128], strides = [1, 1]} : vector<64x256xf32> to vector<8x128xf32>
    %cst_9 = arith.constant dense<0.000000e+00> : vector<8x128xf32>
    %29 = tpu.matmul %27, %3, %cst_9 {dimension_numbers = #tpu.dot_dimension_numbers<[1], [0], [0], [1], [0, 0, 1, 1], [], []>} : vector<8x32xf32>, vector<32x128xf32>, vector<8x128xf32> -> vector<8x128xf32>
    %30 = arith.addf %28, %29 : vector<8x128xf32>
    %31 = vector.extract_strided_slice %30 {offsets = [0, 0], sizes = [8, 96], strides = [1, 1]} : vector<8x128xf32> to vector<8x96xf32>
    %cst_10 = arith.constant 5.000000e-01 : f32
    %32 = vector.broadcast %cst_10 : f32 to vector<8x96xf32>
    %33 = arith.mulf %32, %31 : vector<8x96xf32>
    %34 = math.tanh %33 : vector<8x96xf32>
    %cst_11 = arith.constant 5.000000e-01 : f32
    %35 = vector.broadcast %cst_11 : f32 to vector<8x96xf32>
    %36 = arith.mulf %35, %34 : vector<8x96xf32>
    %cst_12 = arith.constant 5.000000e-01 : f32
    %37 = vector.broadcast %cst_12 : f32 to vector<8x96xf32>
    %38 = arith.addf %36, %37 : vector<8x96xf32>
    %39 = vector.extract_strided_slice %38 {offsets = [0, 0], sizes = [8, 32], strides = [1, 1]} : vector<8x96xf32> to vector<8x32xf32>
    %40 = vector.extract_strided_slice %38 {offsets = [0, 32], sizes = [8, 32], strides = [1, 1]} : vector<8x96xf32> to vector<8x32xf32>
    %41 = vector.extract_strided_slice %38 {offsets = [0, 64], sizes = [8, 32], strides = [1, 1]} : vector<8x96xf32> to vector<8x32xf32>
    %42 = vector.extract_strided_slice %30 {offsets = [0, 96], sizes = [8, 32], strides = [1, 1]} : vector<8x128xf32> to vector<8x32xf32>
    %43 = math.tanh %42 : vector<8x32xf32>
    %44 = arith.mulf %40, %25 : vector<8x32xf32>
    %45 = arith.mulf %39, %43 : vector<8x32xf32>
    %46 = arith.addf %44, %45 : vector<8x32xf32>
    %47 = math.tanh %46 : vector<8x32xf32>
    %48 = arith.mulf %41, %47 : vector<8x32xf32>
    %49 = vector.extract_strided_slice %4 {offsets = [16, 0], sizes = [8, 128], strides = [1, 1]} : vector<64x256xf32> to vector<8x128xf32>
    %cst_13 = arith.constant dense<0.000000e+00> : vector<8x128xf32>
    %50 = tpu.matmul %48, %3, %cst_13 {dimension_numbers = #tpu.dot_dimension_numbers<[1], [0], [0], [1], [0, 0, 1, 1], [], []>} : vector<8x32xf32>, vector<32x128xf32>, vector<8x128xf32> -> vector<8x128xf32>
    %51 = arith.addf %49, %50 : vector<8x128xf32>
    %52 = vector.extract_strided_slice %51 {offsets = [0, 0], sizes = [8, 96], strides = [1, 1]} : vector<8x128xf32> to vector<8x96xf32>
    %cst_14 = arith.constant 5.000000e-01 : f32
    %53 = vector.broadcast %cst_14 : f32 to vector<8x96xf32>
    %54 = arith.mulf %53, %52 : vector<8x96xf32>
    %55 = math.tanh %54 : vector<8x96xf32>
    %cst_15 = arith.constant 5.000000e-01 : f32
    %56 = vector.broadcast %cst_15 : f32 to vector<8x96xf32>
    %57 = arith.mulf %56, %55 : vector<8x96xf32>
    %cst_16 = arith.constant 5.000000e-01 : f32
    %58 = vector.broadcast %cst_16 : f32 to vector<8x96xf32>
    %59 = arith.addf %57, %58 : vector<8x96xf32>
    %60 = vector.extract_strided_slice %59 {offsets = [0, 0], sizes = [8, 32], strides = [1, 1]} : vector<8x96xf32> to vector<8x32xf32>
    %61 = vector.extract_strided_slice %59 {offsets = [0, 32], sizes = [8, 32], strides = [1, 1]} : vector<8x96xf32> to vector<8x32xf32>
    %62 = vector.extract_strided_slice %59 {offsets = [0, 64], sizes = [8, 32], strides = [1, 1]} : vector<8x96xf32> to vector<8x32xf32>
    %63 = vector.extract_strided_slice %51 {offsets = [0, 96], sizes = [8, 32], strides = [1, 1]} : vector<8x128xf32> to vector<8x32xf32>
    %64 = math.tanh %63 : vector<8x32xf32>
    %65 = arith.mulf %61, %46 : vector<8x32xf32>
    %66 = arith.mulf %60, %64 : vector<8x32xf32>
    %67 = arith.addf %65, %66 : vector<8x32xf32>
    %68 = math.tanh %67 : vector<8x32xf32>
    %69 = arith.mulf %62, %68 : vector<8x32xf32>
    %70 = vector.extract_strided_slice %4 {offsets = [24, 0], sizes = [8, 128], strides = [1, 1]} : vector<64x256xf32> to vector<8x128xf32>
    %cst_17 = arith.constant dense<0.000000e+00> : vector<8x128xf32>
    %71 = tpu.matmul %69, %3, %cst_17 {dimension_numbers = #tpu.dot_dimension_numbers<[1], [0], [0], [1], [0, 0, 1, 1], [], []>} : vector<8x32xf32>, vector<32x128xf32>, vector<8x128xf32> -> vector<8x128xf32>
    %72 = arith.addf %70, %71 : vector<8x128xf32>
    %73 = vector.extract_strided_slice %72 {offsets = [0, 0], sizes = [8, 96], strides = [1, 1]} : vector<8x128xf32> to vector<8x96xf32>
    %cst_18 = arith.constant 5.000000e-01 : f32
    %74 = vector.broadcast %cst_18 : f32 to vector<8x96xf32>
    %75 = arith.mulf %74, %73 : vector<8x96xf32>
    %76 = math.tanh %75 : vector<8x96xf32>
    %cst_19 = arith.constant 5.000000e-01 : f32
    %77 = vector.broadcast %cst_19 : f32 to vector<8x96xf32>
    %78 = arith.mulf %77, %76 : vector<8x96xf32>
    %cst_20 = arith.constant 5.000000e-01 : f32
    %79 = vector.broadcast %cst_20 : f32 to vector<8x96xf32>
    %80 = arith.addf %78, %79 : vector<8x96xf32>
    %81 = vector.extract_strided_slice %80 {offsets = [0, 0], sizes = [8, 32], strides = [1, 1]} : vector<8x96xf32> to vector<8x32xf32>
    %82 = vector.extract_strided_slice %80 {offsets = [0, 32], sizes = [8, 32], strides = [1, 1]} : vector<8x96xf32> to vector<8x32xf32>
    %83 = vector.extract_strided_slice %80 {offsets = [0, 64], sizes = [8, 32], strides = [1, 1]} : vector<8x96xf32> to vector<8x32xf32>
    %84 = vector.extract_strided_slice %72 {offsets = [0, 96], sizes = [8, 32], strides = [1, 1]} : vector<8x128xf32> to vector<8x32xf32>
    %85 = math.tanh %84 : vector<8x32xf32>
    %86 = arith.mulf %82, %67 : vector<8x32xf32>
    %87 = arith.mulf %81, %85 : vector<8x32xf32>
    %88 = arith.addf %86, %87 : vector<8x32xf32>
    %89 = math.tanh %88 : vector<8x32xf32>
    %90 = arith.mulf %83, %89 : vector<8x32xf32>
    %91 = vector.extract_strided_slice %4 {offsets = [32, 0], sizes = [8, 128], strides = [1, 1]} : vector<64x256xf32> to vector<8x128xf32>
    %cst_21 = arith.constant dense<0.000000e+00> : vector<8x128xf32>
    %92 = tpu.matmul %90, %3, %cst_21 {dimension_numbers = #tpu.dot_dimension_numbers<[1], [0], [0], [1], [0, 0, 1, 1], [], []>} : vector<8x32xf32>, vector<32x128xf32>, vector<8x128xf32> -> vector<8x128xf32>
    %93 = arith.addf %91, %92 : vector<8x128xf32>
    %94 = vector.extract_strided_slice %93 {offsets = [0, 0], sizes = [8, 96], strides = [1, 1]} : vector<8x128xf32> to vector<8x96xf32>
    %cst_22 = arith.constant 5.000000e-01 : f32
    %95 = vector.broadcast %cst_22 : f32 to vector<8x96xf32>
    %96 = arith.mulf %95, %94 : vector<8x96xf32>
    %97 = math.tanh %96 : vector<8x96xf32>
    %cst_23 = arith.constant 5.000000e-01 : f32
    %98 = vector.broadcast %cst_23 : f32 to vector<8x96xf32>
    %99 = arith.mulf %98, %97 : vector<8x96xf32>
    %cst_24 = arith.constant 5.000000e-01 : f32
    %100 = vector.broadcast %cst_24 : f32 to vector<8x96xf32>
    %101 = arith.addf %99, %100 : vector<8x96xf32>
    %102 = vector.extract_strided_slice %101 {offsets = [0, 0], sizes = [8, 32], strides = [1, 1]} : vector<8x96xf32> to vector<8x32xf32>
    %103 = vector.extract_strided_slice %101 {offsets = [0, 32], sizes = [8, 32], strides = [1, 1]} : vector<8x96xf32> to vector<8x32xf32>
    %104 = vector.extract_strided_slice %101 {offsets = [0, 64], sizes = [8, 32], strides = [1, 1]} : vector<8x96xf32> to vector<8x32xf32>
    %105 = vector.extract_strided_slice %93 {offsets = [0, 96], sizes = [8, 32], strides = [1, 1]} : vector<8x128xf32> to vector<8x32xf32>
    %106 = math.tanh %105 : vector<8x32xf32>
    %107 = arith.mulf %103, %88 : vector<8x32xf32>
    %108 = arith.mulf %102, %106 : vector<8x32xf32>
    %109 = arith.addf %107, %108 : vector<8x32xf32>
    %110 = math.tanh %109 : vector<8x32xf32>
    %111 = arith.mulf %104, %110 : vector<8x32xf32>
    %112 = vector.extract_strided_slice %4 {offsets = [40, 0], sizes = [8, 128], strides = [1, 1]} : vector<64x256xf32> to vector<8x128xf32>
    %cst_25 = arith.constant dense<0.000000e+00> : vector<8x128xf32>
    %113 = tpu.matmul %111, %3, %cst_25 {dimension_numbers = #tpu.dot_dimension_numbers<[1], [0], [0], [1], [0, 0, 1, 1], [], []>} : vector<8x32xf32>, vector<32x128xf32>, vector<8x128xf32> -> vector<8x128xf32>
    %114 = arith.addf %112, %113 : vector<8x128xf32>
    %115 = vector.extract_strided_slice %114 {offsets = [0, 0], sizes = [8, 96], strides = [1, 1]} : vector<8x128xf32> to vector<8x96xf32>
    %cst_26 = arith.constant 5.000000e-01 : f32
    %116 = vector.broadcast %cst_26 : f32 to vector<8x96xf32>
    %117 = arith.mulf %116, %115 : vector<8x96xf32>
    %118 = math.tanh %117 : vector<8x96xf32>
    %cst_27 = arith.constant 5.000000e-01 : f32
    %119 = vector.broadcast %cst_27 : f32 to vector<8x96xf32>
    %120 = arith.mulf %119, %118 : vector<8x96xf32>
    %cst_28 = arith.constant 5.000000e-01 : f32
    %121 = vector.broadcast %cst_28 : f32 to vector<8x96xf32>
    %122 = arith.addf %120, %121 : vector<8x96xf32>
    %123 = vector.extract_strided_slice %122 {offsets = [0, 0], sizes = [8, 32], strides = [1, 1]} : vector<8x96xf32> to vector<8x32xf32>
    %124 = vector.extract_strided_slice %122 {offsets = [0, 32], sizes = [8, 32], strides = [1, 1]} : vector<8x96xf32> to vector<8x32xf32>
    %125 = vector.extract_strided_slice %122 {offsets = [0, 64], sizes = [8, 32], strides = [1, 1]} : vector<8x96xf32> to vector<8x32xf32>
    %126 = vector.extract_strided_slice %114 {offsets = [0, 96], sizes = [8, 32], strides = [1, 1]} : vector<8x128xf32> to vector<8x32xf32>
    %127 = math.tanh %126 : vector<8x32xf32>
    %128 = arith.mulf %124, %109 : vector<8x32xf32>
    %129 = arith.mulf %123, %127 : vector<8x32xf32>
    %130 = arith.addf %128, %129 : vector<8x32xf32>
    %131 = math.tanh %130 : vector<8x32xf32>
    %132 = arith.mulf %125, %131 : vector<8x32xf32>
    %133 = vector.extract_strided_slice %4 {offsets = [48, 0], sizes = [8, 128], strides = [1, 1]} : vector<64x256xf32> to vector<8x128xf32>
    %cst_29 = arith.constant dense<0.000000e+00> : vector<8x128xf32>
    %134 = tpu.matmul %132, %3, %cst_29 {dimension_numbers = #tpu.dot_dimension_numbers<[1], [0], [0], [1], [0, 0, 1, 1], [], []>} : vector<8x32xf32>, vector<32x128xf32>, vector<8x128xf32> -> vector<8x128xf32>
    %135 = arith.addf %133, %134 : vector<8x128xf32>
    %136 = vector.extract_strided_slice %135 {offsets = [0, 0], sizes = [8, 96], strides = [1, 1]} : vector<8x128xf32> to vector<8x96xf32>
    %cst_30 = arith.constant 5.000000e-01 : f32
    %137 = vector.broadcast %cst_30 : f32 to vector<8x96xf32>
    %138 = arith.mulf %137, %136 : vector<8x96xf32>
    %139 = math.tanh %138 : vector<8x96xf32>
    %cst_31 = arith.constant 5.000000e-01 : f32
    %140 = vector.broadcast %cst_31 : f32 to vector<8x96xf32>
    %141 = arith.mulf %140, %139 : vector<8x96xf32>
    %cst_32 = arith.constant 5.000000e-01 : f32
    %142 = vector.broadcast %cst_32 : f32 to vector<8x96xf32>
    %143 = arith.addf %141, %142 : vector<8x96xf32>
    %144 = vector.extract_strided_slice %143 {offsets = [0, 0], sizes = [8, 32], strides = [1, 1]} : vector<8x96xf32> to vector<8x32xf32>
    %145 = vector.extract_strided_slice %143 {offsets = [0, 32], sizes = [8, 32], strides = [1, 1]} : vector<8x96xf32> to vector<8x32xf32>
    %146 = vector.extract_strided_slice %143 {offsets = [0, 64], sizes = [8, 32], strides = [1, 1]} : vector<8x96xf32> to vector<8x32xf32>
    %147 = vector.extract_strided_slice %135 {offsets = [0, 96], sizes = [8, 32], strides = [1, 1]} : vector<8x128xf32> to vector<8x32xf32>
    %148 = math.tanh %147 : vector<8x32xf32>
    %149 = arith.mulf %145, %130 : vector<8x32xf32>
    %150 = arith.mulf %144, %148 : vector<8x32xf32>
    %151 = arith.addf %149, %150 : vector<8x32xf32>
    %152 = math.tanh %151 : vector<8x32xf32>
    %153 = arith.mulf %146, %152 : vector<8x32xf32>
    %154 = vector.extract_strided_slice %4 {offsets = [56, 0], sizes = [8, 128], strides = [1, 1]} : vector<64x256xf32> to vector<8x128xf32>
    %cst_33 = arith.constant dense<0.000000e+00> : vector<8x128xf32>
    %155 = tpu.matmul %153, %3, %cst_33 {dimension_numbers = #tpu.dot_dimension_numbers<[1], [0], [0], [1], [0, 0, 1, 1], [], []>} : vector<8x32xf32>, vector<32x128xf32>, vector<8x128xf32> -> vector<8x128xf32>
    %156 = arith.addf %154, %155 : vector<8x128xf32>
    %157 = vector.extract_strided_slice %156 {offsets = [0, 0], sizes = [8, 96], strides = [1, 1]} : vector<8x128xf32> to vector<8x96xf32>
    %cst_34 = arith.constant 5.000000e-01 : f32
    %158 = vector.broadcast %cst_34 : f32 to vector<8x96xf32>
    %159 = arith.mulf %158, %157 : vector<8x96xf32>
    %160 = math.tanh %159 : vector<8x96xf32>
    %cst_35 = arith.constant 5.000000e-01 : f32
    %161 = vector.broadcast %cst_35 : f32 to vector<8x96xf32>
    %162 = arith.mulf %161, %160 : vector<8x96xf32>
    %cst_36 = arith.constant 5.000000e-01 : f32
    %163 = vector.broadcast %cst_36 : f32 to vector<8x96xf32>
    %164 = arith.addf %162, %163 : vector<8x96xf32>
    %165 = vector.extract_strided_slice %164 {offsets = [0, 0], sizes = [8, 32], strides = [1, 1]} : vector<8x96xf32> to vector<8x32xf32>
    %166 = vector.extract_strided_slice %164 {offsets = [0, 32], sizes = [8, 32], strides = [1, 1]} : vector<8x96xf32> to vector<8x32xf32>
    %167 = vector.extract_strided_slice %164 {offsets = [0, 64], sizes = [8, 32], strides = [1, 1]} : vector<8x96xf32> to vector<8x32xf32>
    %168 = vector.extract_strided_slice %156 {offsets = [0, 96], sizes = [8, 32], strides = [1, 1]} : vector<8x128xf32> to vector<8x32xf32>
    %169 = math.tanh %168 : vector<8x32xf32>
    %170 = arith.mulf %166, %151 : vector<8x32xf32>
    %171 = arith.mulf %165, %169 : vector<8x32xf32>
    %172 = arith.addf %170, %171 : vector<8x32xf32>
    %173 = math.tanh %172 : vector<8x32xf32>
    %174 = arith.mulf %167, %173 : vector<8x32xf32>
    %175 = vector.extract_strided_slice %4 {offsets = [56, 128], sizes = [8, 128], strides = [1, 1]} : vector<64x256xf32> to vector<8x128xf32>
    %176 = vector.extract_strided_slice %175 {offsets = [0, 0], sizes = [8, 96], strides = [1, 1]} : vector<8x128xf32> to vector<8x96xf32>
    %cst_37 = arith.constant 5.000000e-01 : f32
    %177 = vector.broadcast %cst_37 : f32 to vector<8x96xf32>
    %178 = arith.mulf %177, %176 : vector<8x96xf32>
    %179 = math.tanh %178 : vector<8x96xf32>
    %cst_38 = arith.constant 5.000000e-01 : f32
    %180 = vector.broadcast %cst_38 : f32 to vector<8x96xf32>
    %181 = arith.mulf %180, %179 : vector<8x96xf32>
    %cst_39 = arith.constant 5.000000e-01 : f32
    %182 = vector.broadcast %cst_39 : f32 to vector<8x96xf32>
    %183 = arith.addf %181, %182 : vector<8x96xf32>
    %184 = vector.extract_strided_slice %183 {offsets = [0, 0], sizes = [8, 32], strides = [1, 1]} : vector<8x96xf32> to vector<8x32xf32>
    %185 = vector.extract_strided_slice %183 {offsets = [0, 64], sizes = [8, 32], strides = [1, 1]} : vector<8x96xf32> to vector<8x32xf32>
    %186 = vector.extract_strided_slice %175 {offsets = [0, 96], sizes = [8, 32], strides = [1, 1]} : vector<8x128xf32> to vector<8x32xf32>
    %187 = math.tanh %186 : vector<8x32xf32>
    %188 = arith.mulf %184, %187 : vector<8x32xf32>
    %189 = math.tanh %188 : vector<8x32xf32>
    %190 = arith.mulf %185, %189 : vector<8x32xf32>
    %c0_40 = arith.constant 0 : index
    %c0_41 = arith.constant 0 : index
    %191 = vector.load %arg2[%c0_40, %c0_41] : memref<65x2xf32, #tpu.memory_space<vmem>>, vector<65x2xf32>
    %192 = vector.extract_strided_slice %191 {offsets = [0, 0], sizes = [32, 2], strides = [1, 1]} : vector<65x2xf32> to vector<32x2xf32>
    %cst_42 = arith.constant dense<0.000000e+00> : vector<8x2xf32>
    %193 = tpu.matmul %174, %192, %cst_42 {dimension_numbers = #tpu.dot_dimension_numbers<[1], [0], [0], [1], [0, 0, 1, 1], [], []>} : vector<8x32xf32>, vector<32x2xf32>, vector<8x2xf32> -> vector<8x2xf32>
    %194 = vector.extract_strided_slice %191 {offsets = [32, 0], sizes = [32, 2], strides = [1, 1]} : vector<65x2xf32> to vector<32x2xf32>
    %cst_43 = arith.constant dense<0.000000e+00> : vector<8x2xf32>
    %195 = tpu.matmul %190, %194, %cst_43 {dimension_numbers = #tpu.dot_dimension_numbers<[1], [0], [0], [1], [0, 0, 1, 1], [], []>} : vector<8x32xf32>, vector<32x2xf32>, vector<8x2xf32> -> vector<8x2xf32>
    %196 = arith.addf %193, %195 : vector<8x2xf32>
    %197 = vector.extract_strided_slice %191 {offsets = [64, 0], sizes = [1, 2], strides = [1, 1]} : vector<65x2xf32> to vector<1x2xf32>
    %198 = vector.broadcast %197 : vector<1x2xf32> to vector<8x2xf32>
    %199 = arith.addf %196, %198 : vector<8x2xf32>
    %c0_44 = arith.constant 0 : index
    %c0_45 = arith.constant 0 : index
    %200 = vector.load %arg3[%c0_44, %c0_45] : memref<8x2xf32, #tpu.memory_space<vmem>>, vector<8x2xf32>
    tpu.vector_store %arg3[%c0_44, %c0_45], %199 {strides = array<i32>} : memref<8x2xf32, #tpu.memory_space<vmem>>, vector<8x2xf32>,
    return
  }
}

</mosaic_0001>

<llo_original>
// kernel: tpu_custom_call.1
$region0: #{tpu_custom_call.1}
  #allocation0 [shape = 'u32[]', space=smem, size = 0x4, offset = 0x4, fixed_abs, tag = 'smem constant byte address 0x4 - core index']
  #allocation1 [shape = 'u32[144,128]{1,0:T(1,128)}', space=vmem, size = 0x12000, scoped, tag = 'internal scratch']
  %s0 = inlined_call_operand.vmem [shape: f32[64,8], index: 0, kind: input, shape index: {}]
  %s1 = inlined_call_operand.vmem [shape: f32[40,256], index: 1, kind: input, shape index: {}]
  %s2 = inlined_call_operand.vmem [shape: f32[65,2], index: 2, kind: input, shape index: {}]
  %s3 = inlined_call_operand.vmem [shape: f32[8,2], index: 3, kind: output, shape index: {}]
  %s4 = sld [smem:[#allocation0]]
  $region22: #{tpu_custom_call.1} parent=0
    _
  %s6 = ssub.s32 1, %s4
  %s7 = scalar_select 0, %s6, %s4
  // Predicated region
  $region2: #{tpu_custom_call.1} parent=0 // pred_check
    _
  $region3: #{tpu_custom_call.1} parent=0 // pred_check_branch
    %9 = sbr.rel (0) target = $region5
  $region4: #{tpu_custom_call.1} parent=0 // pred_region
    _
  $region5: #{tpu_custom_call.1} parent=0 // pred_fallthru
    _
  // Predicated region
  $region6: #{tpu_custom_call.1} parent=0 // pred_check
    _
  $region7: #{tpu_custom_call.1} parent=0 // pred_check_branch
    %11 = sbr.rel (0) target = $region9
  $region8: #{tpu_custom_call.1} parent=0 // pred_region
    _
  $region9: #{tpu_custom_call.1} parent=0 // pred_fallthru
    _
  // Predicated region
  $region10: #{tpu_custom_call.1} parent=0 // pred_check
    _
  $region11: #{tpu_custom_call.1} parent=0 // pred_check_branch
    %13 = sbr.rel (0) target = $region13
  $region12: #{tpu_custom_call.1} parent=0 // pred_region
    _
  $region13: #{tpu_custom_call.1} parent=0 // pred_fallthru
    _
  %v14 = vld [vmem:[%s0] sm:$0xff]
  %v15 = vld [vmem:[%s0 + $0x8] sm:$0xff]
  %v16 = vld [vmem:[%s0 + $0x10] sm:$0xff]
  %v17 = vld [vmem:[%s0 + $0x18] sm:$0xff]
  %v18 = vld [vmem:[%s0 + $0x20] sm:$0xff]
  %v19 = vld [vmem:[%s0 + $0x28] sm:$0xff]
  %v20 = vld [vmem:[%s0 + $0x30] sm:$0xff]
  %v21 = vld [vmem:[%s0 + $0x38] sm:$0xff]
  %v22 = vld [vmem:[%s1] sm:$0xff]
  %v23 = vld [vmem:[%s1 + $0x8] sm:$0xff]
  %v24 = vld [vmem:[%s1 + $0x10] sm:$0xff]
  %v25 = vld [vmem:[%s1 + $0x20] sm:$0xff]
  %v26 = vld [vmem:[%s1 + $0x30] sm:$0xff]
  %v27 = vld [vmem:[%s1 + $0x40] sm:$0xff]
  %vm28 = vcmask 64512
  %v30 = vsel %vm28, %v14, 0
  %v33 = vsel %vm28, %v15, 0
  %v36 = vsel %vm28, %v16, 0
  %v39 = vsel %vm28, %v17, 0
  %v42 = vsel %vm28, %v18, 0
  %v45 = vsel %vm28, %v19, 0
  %v48 = vsel %vm28, %v20, 0
  %v51 = vsel %vm28, %v21, 0
  %53 = vmatprep.subr.mxu0 %v23
  %54 = vmatpush1.msra.mxu0 %v22
  %55 = vmatprep.subr.mxu0 0.0
  %56 = vmatpush1.msra.mxu0 0.0
  %57 = vmatprep.subr.mxu0 0.0
  %58 = vmatpush1.msra.mxu0 0.0
  %59 = vmatprep.subr.mxu0 0.0
  %60 = vmatpush1.msra.mxu0 0.0
  %61 = vmatprep.subr.mxu0 0.0
  %62 = vmatpush1.msra.mxu0 0.0
  %63 = vmatprep.subr.mxu0 0.0
  %64 = vmatpush1.msra.mxu0 0.0
  %65 = vmatprep.subr.mxu0 0.0
  %66 = vmatpush1.msra.mxu0 0.0
  %67 = vmatprep.subr.mxu0 0.0
  %68 = vmatpush1.msra.mxu0 0.0
  %69 = vmatprep.subr.mxu0 0.0
  %70 = vmatpush1.msra.mxu0 0.0
  %71 = vmatprep.subr.mxu0 0.0
  %72 = vmatpush1.msra.mxu0 0.0
  %73 = vmatprep.subr.mxu0 0.0
  %74 = vmatpush1.msra.mxu0 0.0
  %75 = vmatprep.subr.mxu0 0.0
  %76 = vmatpush1.msra.mxu0 0.0
  %77 = vmatprep.subr.mxu0 0.0
  %78 = vmatpush1.msra.mxu0 0.0
  %79 = vmatprep.subr.mxu0 0.0
  %80 = vmatpush1.msra.mxu0 0.0
  %81 = vmatprep.subr.mxu0 0.0
  %82 = vmatpush1.msra.mxu0 0.0
  %83 = vmatprep.subr.mxu0 0.0
  %84 = vmatpush1.msra.mxu0 0.0
  %85 = vmatprep.subr.mxu0 0.0
  %86 = vmatpush1.msra.mxu0 0.0
  %87 = vmatprep.subr.mxu0 0.0
  %88 = vmatpush1.msra.mxu0 0.0
  %89 = vmatprep.subr.mxu0 0.0
  %90 = vmatpush1.msra.mxu0 0.0
  %91 = vmatprep.subr.mxu0 0.0
  %92 = vmatpush1.msra.mxu0 0.0
  %93 = vmatprep.subr.mxu0 0.0
  %94 = vmatpush1.msra.mxu0 0.0
  %95 = vmatprep.subr.mxu0 0.0
  %96 = vmatpush1.msra.mxu0 0.0
  %97 = vmatprep.subr.mxu0 0.0
  %98 = vmatpush1.msra.mxu0 0.0
  %99 = vmatprep.subr.mxu0 0.0
  %100 = vmatpush1.msra.mxu0 0.0
  %101 = vmatprep.subr.mxu0 0.0
  %102 = vmatpush1.msra.mxu0 0.0
  %103 = vmatprep.subr.mxu0 0.0
  %104 = vmatpush1.msra.mxu0 0.0
  %105 = vmatprep.subr.mxu0 0.0
  %106 = vmatpush1.msra.mxu0 0.0
  %107 = vmatprep.subr.mxu0 0.0
  %108 = vmatpush1.msra.mxu0 0.0
  %109 = vmatprep.subr.mxu0 0.0
  %110 = vmatpush1.msra.mxu0 0.0
  %111 = vmatprep.subr.mxu0 0.0
  %112 = vmatpush1.msra.mxu0 0.0
  %113 = vmatprep.subr.mxu0 0.0
  %114 = vmatpush1.msra.mxu0 0.0
  %115 = vmatprep.subr.mxu0 0.0
  %116 = vmatpush1.msra.mxu0 0.0
  %117 = vmatprep.mubr.f32.mxu0 0.0
  %118 = vmatmul.mubr.f32.gmra.mrb[0].mxu0 %v30
  %v119 = vpop.f32.mrb[0].mxu0
  %v120 = vadd.f32 0.0, %v119
  %v121 = vpop.f32.mrb[0].mxu0
  %122 = vmatprep.mubr.f32.mxu0 0.0
  %123 = vmatmul.mubr.f32.gmra.mrb[0].mxu0 %v33
  %v124 = vpop.f32.mrb[0].mxu0
  %v125 = vadd.f32 0.0, %v124
  %v126 = vpop.f32.mrb[0].mxu0
  %127 = vmatprep.mubr.f32.mxu0 0.0
  %128 = vmatmul.mubr.f32.gmra.mrb[0].mxu0 %v36
  %v129 = vpop.f32.mrb[0].mxu0
  %v130 = vadd.f32 0.0, %v129
  %v131 = vpop.f32.mrb[0].mxu0
  %132 = vmatprep.mubr.f32.mxu0 0.0
  %133 = vmatmul.mubr.f32.gmra.mrb[0].mxu0 %v39
  %v134 = vpop.f32.mrb[0].mxu0
  %v135 = vadd.f32 0.0, %v134
  %v136 = vpop.f32.mrb[0].mxu0
  %137 = vmatprep.mubr.f32.mxu0 0.0
  %138 = vmatmul.mubr.f32.gmra.mrb[0].mxu0 %v42
  %v139 = vpop.f32.mrb[0].mxu0
  %v140 = vadd.f32 0.0, %v139
  %v141 = vpop.f32.mrb[0].mxu0
  %142 = vmatprep.mubr.f32.mxu0 0.0
  %143 = vmatmul.mubr.f32.gmra.mrb[0].mxu0 %v45
  %v144 = vpop.f32.mrb[0].mxu0
  %v145 = vadd.f32 0.0, %v144
  %v146 = vpop.f32.mrb[0].mxu0
  %147 = vmatprep.mubr.f32.mxu0 0.0
  %148 = vmatmul.mubr.f32.gmra.mrb[0].mxu0 %v48
  %v149 = vpop.f32.mrb[0].mxu0
  %v150 = vadd.f32 0.0, %v149
  %v151 = vpop.f32.mrb[0].mxu0
  %152 = vmatprep.mubr.f32.mxu0 0.0
  %153 = vmatmul.mubr.f32.gmra.mrb[0].mxu0 %v51
  %v154 = vpop.f32.mrb[0].mxu0
  %v155 = vadd.f32 0.0, %v154
  %v156 = vpop.f32.mrb[0].mxu0
  %v157 = vadd.f32 0.0, %v156
  %158 = vdwg.mxu0
  %vm159 = vcmask 261120
  %v161 = vsel %vm159, 0.0, 0
  %163 = vmatprep.subr.mxu0 0.0
  %164 = vmatpush1.msra.mxu0 %v24
  %165 = vmatprep.subr.mxu0 0.0
  %166 = vmatpush1.msra.mxu0 %v25
  %167 = vmatprep.subr.mxu0 0.0
  %168 = vmatpush1.msra.mxu0 %v26
  %169 = vmatprep.subr.mxu0 0.0
  %170 = vmatpush1.msra.mxu0 %v27
  %171 = vmatprep.subr.mxu0 0.0
  %172 = vmatpush1.msra.mxu0 0.0
  %173 = vmatprep.subr.mxu0 0.0
  %174 = vmatpush1.msra.mxu0 0.0
  %175 = vmatprep.subr.mxu0 0.0
  %176 = vmatpush1.msra.mxu0 0.0
  %177 = vmatprep.subr.mxu0 0.0
  %178 = vmatpush1.msra.mxu0 0.0
  %179 = vmatprep.subr.mxu0 0.0
  %180 = vmatpush1.msra.mxu0 0.0
  %181 = vmatprep.subr.mxu0 0.0
  %182 = vmatpush1.msra.mxu0 0.0
  %183 = vmatprep.subr.mxu0 0.0
  %184 = vmatpush1.msra.mxu0 0.0
  %185 = vmatprep.subr.mxu0 0.0
  %186 = vmatpush1.msra.mxu0 0.0
  %187 = vmatprep.subr.mxu0 0.0
  %188 = vmatpush1.msra.mxu0 0.0
  %189 = vmatprep.subr.mxu0 0.0
  %190 = vmatpush1.msra.mxu0 0.0
  %191 = vmatprep.subr.mxu0 0.0
  %192 = vmatpush1.msra.mxu0 0.0
  %193 = vmatprep.subr.mxu0 0.0
  %194 = vmatpush1.msra.mxu0 0.0
  %195 = vmatprep.subr.mxu0 0.0
  %196 = vmatpush1.msra.mxu0 0.0
  %197 = vmatprep.subr.mxu0 0.0
  %198 = vmatpush1.msra.mxu0 0.0
  %199 = vmatprep.subr.mxu0 0.0
  %200 = vmatpush1.msra.mxu0 0.0
  %201 = vmatprep.subr.mxu0 0.0
  %202 = vmatpush1.msra.mxu0 0.0
  %203 = vmatprep.subr.mxu0 0.0
  %204 = vmatpush1.msra.mxu0 0.0
  %205 = vmatprep.subr.mxu0 0.0
  %206 = vmatpush1.msra.mxu0 0.0
  %207 = vmatprep.subr.mxu0 0.0
  %208 = vmatpush1.msra.mxu0 0.0
  %209 = vmatprep.subr.mxu0 0.0
  %210 = vmatpush1.msra.mxu0 0.0
  %211 = vmatprep.subr.mxu0 0.0
  %212 = vmatpush1.msra.mxu0 0.0
  %213 = vmatprep.subr.mxu0 0.0
  %214 = vmatpush1.msra.mxu0 0.0
  %215 = vmatprep.subr.mxu0 0.0
  %216 = vmatpush1.msra.mxu0 0.0
  %217 = vmatprep.subr.mxu0 0.0
  %218 = vmatpush1.msra.mxu0 0.0
  %219 = vmatprep.subr.mxu0 0.0
  %220 = vmatpush1.msra.mxu0 0.0
  %221 = vmatprep.subr.mxu0 0.0
  %222 = vmatpush1.msra.mxu0 0.0
  %223 = vmatprep.subr.mxu0 0.0
  %224 = vmatpush1.msra.mxu0 0.0
  %225 = vmatprep.subr.mxu0 0.0
  %226 = vmatpush1.msra.mxu0 0.0
  %227 = vmatprep.mubr.f32.mxu0 0.0
  %228 = vmatmul.mubr.f32.gmra.mrb[0].mxu0 %v161
  %v229 = vpop.f32.mrb[0].mxu0
  %v230 = vadd.f32 0.0, %v229
  %v231 = vpop.f32.mrb[0].mxu0
  %232 = vdwg.mxu0
  %v233 = vadd.f32 %v120, %v230
  %v234 = vmul.f32 %v233, 0.5
  %v235 = vtanh.pop %v234
  %v236 = vmul.f32 %v235, 0.5
  %v237 = vadd.f32 %v236, 0.5
  %v238 = vtanh.pop %v233
  %v239 = vmul.f32 %v237, 0.0
  %241 = vrot.lane.b32.xlu0 %v238, 32
  %v242 = vpop.permute.xlu0 %241
  %v244 = vmul.f32 %v237, %v242
  %246 = vrot.lane.b32.xlu0 %v244, 32
  %v247 = vpop.permute.xlu0 %246
  %v249 = vadd.f32 %v239, %v247
  %v250 = vtanh.pop %v249
  %252 = vrot.lane.b32.xlu0 %v250, 32
  %v253 = vpop.permute.xlu0 %252
  %v255 = vmul.f32 %v237, %v253
  %257 = vrot.lane.b32.xlu0 %v255, 64
  %v258 = vpop.permute.xlu0 %257
  %v259 = vsel %vm159, %v258, 0
  %261 = vmatprep.subr.mxu0 0.0
  %262 = vmatpush1.msra.mxu0 %v24
  %263 = vmatprep.subr.mxu0 0.0
  %264 = vmatpush1.msra.mxu0 %v25
  %265 = vmatprep.subr.mxu0 0.0
  %266 = vmatpush1.msra.mxu0 %v26
  %267 = vmatprep.subr.mxu0 0.0
  %268 = vmatpush1.msra.mxu0 %v27
  %269 = vmatprep.subr.mxu0 0.0
  %270 = vmatpush1.msra.mxu0 0.0
  %271 = vmatprep.subr.mxu0 0.0
  %272 = vmatpush1.msra.mxu0 0.0
  %273 = vmatprep.subr.mxu0 0.0
  %274 = vmatpush1.msra.mxu0 0.0
  %275 = vmatprep.subr.mxu0 0.0
  %276 = vmatpush1.msra.mxu0 0.0
  %277 = vmatprep.subr.mxu0 0.0
  %278 = vmatpush1.msra.mxu0 0.0
  %279 = vmatprep.subr.mxu0 0.0
  %280 = vmatpush1.msra.mxu0 0.0
  %281 = vmatprep.subr.mxu0 0.0
  %282 = vmatpush1.msra.mxu0 0.0
  %283 = vmatprep.subr.mxu0 0.0
  %284 = vmatpush1.msra.mxu0 0.0
  %285 = vmatprep.subr.mxu0 0.0
  %286 = vmatpush1.msra.mxu0 0.0
  %287 = vmatprep.subr.mxu0 0.0
  %288 = vmatpush1.msra.mxu0 0.0
  %289 = vmatprep.subr.mxu0 0.0
  %290 = vmatpush1.msra.mxu0 0.0
  %291 = vmatprep.subr.mxu0 0.0
  %292 = vmatpush1.msra.mxu0 0.0
  %293 = vmatprep.subr.mxu0 0.0
  %294 = vmatpush1.msra.mxu0 0.0
  %295 = vmatprep.subr.mxu0 0.0
  %296 = vmatpush1.msra.mxu0 0.0
  %297 = vmatprep.subr.mxu0 0.0
  %298 = vmatpush1.msra.mxu0 0.0
  %299 = vmatprep.subr.mxu0 0.0
  %300 = vmatpush1.msra.mxu0 0.0
  %301 = vmatprep.subr.mxu0 0.0
  %302 = vmatpush1.msra.mxu0 0.0
  %303 = vmatprep.subr.mxu0 0.0
  %304 = vmatpush1.msra.mxu0 0.0
  %305 = vmatprep.subr.mxu0 0.0
  %306 = vmatpush1.msra.mxu0 0.0
  %307 = vmatprep.subr.mxu0 0.0
  %308 = vmatpush1.msra.mxu0 0.0
  %309 = vmatprep.subr.mxu0 0.0
  %310 = vmatpush1.msra.mxu0 0.0
  %311 = vmatprep.subr.mxu0 0.0
  %312 = vmatpush1.msra.mxu0 0.0
  %313 = vmatprep.subr.mxu0 0.0
  %314 = vmatpush1.msra.mxu0 0.0
  %315 = vmatprep.subr.mxu0 0.0
  %316 = vmatpush1.msra.mxu0 0.0
  %317 = vmatprep.subr.mxu0 0.0
  %318 = vmatpush1.msra.mxu0 0.0
  %319 = vmatprep.subr.mxu0 0.0
  %320 = vmatpush1.msra.mxu0 0.0
  %321 = vmatprep.subr.mxu0 0.0
  %322 = vmatpush1.msra.mxu0 0.0
  %323 = vmatprep.subr.mxu0 0.0
  %324 = vmatpush1.msra.mxu0 0.0
  %325 = vmatprep.mubr.f32.mxu0 0.0
  %326 = vmatmul.mubr.f32.gmra.mrb[0].mxu0 %v259
  %v327 = vpop.f32.mrb[0].mxu0
  %v328 = vadd.f32 0.0, %v327
  %v329 = vpop.f32.mrb[0].mxu0
  %330 = vdwg.mxu0
  %v331 = vadd.f32 %v125, %v328
  %v332 = vmul.f32 %v331, 0.5
  %v333 = vtanh.pop %v332
  %v334 = vmul.f32 %v333, 0.5
  %v335 = vadd.f32 %v334, 0.5
  %v336 = vtanh.pop %v331
  %v337 = vmul.f32 %v335, %v249
  %339 = vrot.lane.b32.xlu0 %v336, 32
  %v340 = vpop.permute.xlu0 %339
  %v342 = vmul.f32 %v335, %v340
  %344 = vrot.lane.b32.xlu0 %v342, 32
  %v345 = vpop.permute.xlu0 %344
  %v347 = vadd.f32 %v337, %v345
  %v348 = vtanh.pop %v347
  %350 = vrot.lane.b32.xlu0 %v348, 32
  %v351 = vpop.permute.xlu0 %350
  %v353 = vmul.f32 %v335, %v351
  %355 = vrot.lane.b32.xlu0 %v353, 64
  %v356 = vpop.permute.xlu0 %355
  %v357 = vsel %vm159, %v356, 0
  %359 = vmatprep.subr.mxu0 0.0
  %360 = vmatpush1.msra.mxu0 %v24
  %361 = vmatprep.subr.mxu0 0.0
  %362 = vmatpush1.msra.mxu0 %v25
  %363 = vmatprep.subr.mxu0 0.0
  %364 = vmatpush1.msra.mxu0 %v26
  %365 = vmatprep.subr.mxu0 0.0
  %366 = vmatpush1.msra.mxu0 %v27
  %367 = vmatprep.subr.mxu0 0.0
  %368 = vmatpush1.msra.mxu0 0.0
  %369 = vmatprep.subr.mxu0 0.0
  %370 = vmatpush1.msra.mxu0 0.0
  %371 = vmatprep.subr.mxu0 0.0
  %372 = vmatpush1.msra.mxu0 0.0
  %373 = vmatprep.subr.mxu0 0.0
  %374 = vmatpush1.msra.mxu0 0.0
  %375 = vmatprep.subr.mxu0 0.0
  %376 = vmatpush1.msra.mxu0 0.0
  %377 = vmatprep.subr.mxu0 0.0
  %378 = vmatpush1.msra.mxu0 0.0
  %379 = vmatprep.subr.mxu0 0.0
  %380 = vmatpush1.msra.mxu0 0.0
  %381 = vmatprep.subr.mxu0 0.0
  %382 = vmatpush1.msra.mxu0 0.0
  %383 = vmatprep.subr.mxu0 0.0
  %384 = vmatpush1.msra.mxu0 0.0
  %385 = vmatprep.subr.mxu0 0.0
  %386 = vmatpush1.msra.mxu0 0.0
  %387 = vmatprep.subr.mxu0 0.0
  %388 = vmatpush1.msra.mxu0 0.0
  %389 = vmatprep.subr.mxu0 0.0
  %390 = vmatpush1.msra.mxu0 0.0
  %391 = vmatprep.subr.mxu0 0.0
  %392 = vmatpush1.msra.mxu0 0.0
  %393 = vmatprep.subr.mxu0 0.0
  %394 = vmatpush1.msra.mxu0 0.0
  %395 = vmatprep.subr.mxu0 0.0
  %396 = vmatpush1.msra.mxu0 0.0
  %397 = vmatprep.subr.mxu0 0.0
  %398 = vmatpush1.msra.mxu0 0.0
  %399 = vmatprep.subr.mxu0 0.0
  %400 = vmatpush1.msra.mxu0 0.0
  %401 = vmatprep.subr.mxu0 0.0
  %402 = vmatpush1.msra.mxu0 0.0
  %403 = vmatprep.subr.mxu0 0.0
  %404 = vmatpush1.msra.mxu0 0.0
  %405 = vmatprep.subr.mxu0 0.0
  %406 = vmatpush1.msra.mxu0 0.0
  %407 = vmatprep.subr.mxu0 0.0
  %408 = vmatpush1.msra.mxu0 0.0
  %409 = vmatprep.subr.mxu0 0.0
  %410 = vmatpush1.msra.mxu0 0.0
  %411 = vmatprep.subr.mxu0 0.0
  %412 = vmatpush1.msra.mxu0 0.0
  %413 = vmatprep.subr.mxu0 0.0
  %414 = vmatpush1.msra.mxu0 0.0
  %415 = vmatprep.subr.mxu0 0.0
  %416 = vmatpush1.msra.mxu0 0.0
  %417 = vmatprep.subr.mxu0 0.0
  %418 = vmatpush1.msra.mxu0 0.0
  %419 = vmatprep.subr.mxu0 0.0
  %420 = vmatpush1.msra.mxu0 0.0
  %421 = vmatprep.subr.mxu0 0.0
  %422 = vmatpush1.msra.mxu0 0.0
  %423 = vmatprep.mubr.f32.mxu0 0.0
  %424 = vmatmul.mubr.f32.gmra.mrb[0].mxu0 %v357
  %v425 = vpop.f32.mrb[0].mxu0
  %v426 = vadd.f32 0.0, %v425
  %v427 = vpop.f32.mrb[0].mxu0
  %428 = vdwg.mxu0
  %v429 = vadd.f32 %v130, %v426
  %v430 = vmul.f32 %v429, 0.5
  %v431 = vtanh.pop %v430
  %v432 = vmul.f32 %v431, 0.5
  %v433 = vadd.f32 %v432, 0.5
  %v434 = vtanh.pop %v429
  %v435 = vmul.f32 %v433, %v347
  %437 = vrot.lane.b32.xlu0 %v434, 32
  %v438 = vpop.permute.xlu0 %437
  %v440 = vmul.f32 %v433, %v438
  %442 = vrot.lane.b32.xlu0 %v440, 32
  %v443 = vpop.permute.xlu0 %442
  %v445 = vadd.f32 %v435, %v443
  %v446 = vtanh.pop %v445
  %448 = vrot.lane.b32.xlu0 %v446, 32
  %v449 = vpop.permute.xlu0 %448
  %v451 = vmul.f32 %v433, %v449
  %453 = vrot.lane.b32.xlu0 %v451, 64
  %v454 = vpop.permute.xlu0 %453
  %v455 = vsel %vm159, %v454, 0
  %457 = vmatprep.subr.mxu0 0.0
  %458 = vmatpush1.msra.mxu0 %v24
  %459 = vmatprep.subr.mxu0 0.0
  %460 = vmatpush1.msra.mxu0 %v25
  %461 = vmatprep.subr.mxu0 0.0
  %462 = vmatpush1.msra.mxu0 %v26
  %463 = vmatprep.subr.mxu0 0.0
  %464 = vmatpush1.msra.mxu0 %v27
  %465 = vmatprep.subr.mxu0 0.0
  %466 = vmatpush1.msra.mxu0 0.0
  %467 = vmatprep.subr.mxu0 0.0
  %468 = vmatpush1.msra.mxu0 0.0
  %469 = vmatprep.subr.mxu0 0.0
  %470 = vmatpush1.msra.mxu0 0.0
  %471 = vmatprep.subr.mxu0 0.0
  %472 = vmatpush1.msra.mxu0 0.0
  %473 = vmatprep.subr.mxu0 0.0
  %474 = vmatpush1.msra.mxu0 0.0
  %475 = vmatprep.subr.mxu0 0.0
  %476 = vmatpush1.msra.mxu0 0.0
  %477 = vmatprep.subr.mxu0 0.0
  %478 = vmatpush1.msra.mxu0 0.0
  %479 = vmatprep.subr.mxu0 0.0
  %480 = vmatpush1.msra.mxu0 0.0
  %481 = vmatprep.subr.mxu0 0.0
  %482 = vmatpush1.msra.mxu0 0.0
  %483 = vmatprep.subr.mxu0 0.0
  %484 = vmatpush1.msra.mxu0 0.0
  %485 = vmatprep.subr.mxu0 0.0
  %486 = vmatpush1.msra.mxu0 0.0
  %487 = vmatprep.subr.mxu0 0.0
  %488 = vmatpush1.msra.mxu0 0.0
  %489 = vmatprep.subr.mxu0 0.0
  %490 = vmatpush1.msra.mxu0 0.0
  %491 = vmatprep.subr.mxu0 0.0
  %492 = vmatpush1.msra.mxu0 0.0
  %493 = vmatprep.subr.mxu0 0.0
  %494 = vmatpush1.msra.mxu0 0.0
  %495 = vmatprep.subr.mxu0 0.0
  %496 = vmatpush1.msra.mxu0 0.0
  %497 = vmatprep.subr.mxu0 0.0
  %498 = vmatpush1.msra.mxu0 0.0
  %499 = vmatprep.subr.mxu0 0.0
  %500 = vmatpush1.msra.mxu0 0.0
  %501 = vmatprep.subr.mxu0 0.0
  %502 = vmatpush1.msra.mxu0 0.0
  %503 = vmatprep.subr.mxu0 0.0
  %504 = vmatpush1.msra.mxu0 0.0
  %505 = vmatprep.subr.mxu0 0.0
  %506 = vmatpush1.msra.mxu0 0.0
  %507 = vmatprep.subr.mxu0 0.0
  %508 = vmatpush1.msra.mxu0 0.0
  %509 = vmatprep.subr.mxu0 0.0
  %510 = vmatpush1.msra.mxu0 0.0
  %511 = vmatprep.subr.mxu0 0.0
  %512 = vmatpush1.msra.mxu0 0.0
  %513 = vmatprep.subr.mxu0 0.0
  %514 = vmatpush1.msra.mxu0 0.0
  %515 = vmatprep.subr.mxu0 0.0
  %516 = vmatpush1.msra.mxu0 0.0
  %517 = vmatprep.subr.mxu0 0.0
  %518 = vmatpush1.msra.mxu0 0.0
  %519 = vmatprep.subr.mxu0 0.0
  %520 = vmatpush1.msra.mxu0 0.0
  %521 = vmatprep.mubr.f32.mxu0 0.0
  %522 = vmatmul.mubr.f32.gmra.mrb[0].mxu0 %v455
  %v523 = vpop.f32.mrb[0].mxu0
  %v524 = vadd.f32 0.0, %v523
  %v525 = vpop.f32.mrb[0].mxu0
  %526 = vdwg.mxu0
  %v527 = vadd.f32 %v135, %v524
  %v528 = vmul.f32 %v527, 0.5
  %v529 = vtanh.pop %v528
  %v530 = vmul.f32 %v529, 0.5
  %v531 = vadd.f32 %v530, 0.5
  %v532 = vtanh.pop %v527
  %v533 = vmul.f32 %v531, %v445
  %535 = vrot.lane.b32.xlu0 %v532, 32
  %v536 = vpop.permute.xlu0 %535
  %v538 = vmul.f32 %v531, %v536
  %540 = vrot.lane.b32.xlu0 %v538, 32
  %v541 = vpop.permute.xlu0 %540
  %v543 = vadd.f32 %v533, %v541
  %v544 = vtanh.pop %v543
  %546 = vrot.lane.b32.xlu0 %v544, 32
  %v547 = vpop.permute.xlu0 %546
  %v549 = vmul.f32 %v531, %v547
  %551 = vrot.lane.b32.xlu0 %v549, 64
  %v552 = vpop.permute.xlu0 %551
  %v553 = vsel %vm159, %v552, 0
  %555 = vmatprep.subr.mxu0 0.0
  %556 = vmatpush1.msra.mxu0 %v24
  %557 = vmatprep.subr.mxu0 0.0
  %558 = vmatpush1.msra.mxu0 %v25
  %559 = vmatprep.subr.mxu0 0.0
  %560 = vmatpush1.msra.mxu0 %v26
  %561 = vmatprep.subr.mxu0 0.0
  %562 = vmatpush1.msra.mxu0 %v27
  %563 = vmatprep.subr.mxu0 0.0
  %564 = vmatpush1.msra.mxu0 0.0
  %565 = vmatprep.subr.mxu0 0.0
  %566 = vmatpush1.msra.mxu0 0.0
  %567 = vmatprep.subr.mxu0 0.0
  %568 = vmatpush1.msra.mxu0 0.0
  %569 = vmatprep.subr.mxu0 0.0
  %570 = vmatpush1.msra.mxu0 0.0
  %571 = vmatprep.subr.mxu0 0.0
  %572 = vmatpush1.msra.mxu0 0.0
  %573 = vmatprep.subr.mxu0 0.0
  %574 = vmatpush1.msra.mxu0 0.0
  %575 = vmatprep.subr.mxu0 0.0
  %576 = vmatpush1.msra.mxu0 0.0
  %577 = vmatprep.subr.mxu0 0.0
  %578 = vmatpush1.msra.mxu0 0.0
  %579 = vmatprep.subr.mxu0 0.0
  %580 = vmatpush1.msra.mxu0 0.0
  %581 = vmatprep.subr.mxu0 0.0
  %582 = vmatpush1.msra.mxu0 0.0
  %583 = vmatprep.subr.mxu0 0.0
  %584 = vmatpush1.msra.mxu0 0.0
  %585 = vmatprep.subr.mxu0 0.0
  %586 = vmatpush1.msra.mxu0 0.0
  %587 = vmatprep.subr.mxu0 0.0
  %588 = vmatpush1.msra.mxu0 0.0
  %589 = vmatprep.subr.mxu0 0.0
  %590 = vmatpush1.msra.mxu0 0.0
  %591 = vmatprep.subr.mxu0 0.0
  %592 = vmatpush1.msra.mxu0 0.0
  %593 = vmatprep.subr.mxu0 0.0
  %594 = vmatpush1.msra.mxu0 0.0
  %595 = vmatprep.subr.mxu0 0.0
  %596 = vmatpush1.msra.mxu0 0.0
  %597 = vmatprep.subr.mxu0 0.0
  %598 = vmatpush1.msra.mxu0 0.0
  %599 = vmatprep.subr.mxu0 0.0
  %600 = vmatpush1.msra.mxu0 0.0
  %601 = vmatprep.subr.mxu0 0.0
  %602 = vmatpush1.msra.mxu0 0.0
  %603 = vmatprep.subr.mxu0 0.0
  %604 = vmatpush1.msra.mxu0 0.0
  %605 = vmatprep.subr.mxu0 0.0
  %606 = vmatpush1.msra.mxu0 0.0
  %607 = vmatprep.subr.mxu0 0.0
  %608 = vmatpush1.msra.mxu0 0.0
  %609 = vmatprep.subr.mxu0 0.0
  %610 = vmatpush1.msra.mxu0 0.0
  %611 = vmatprep.subr.mxu0 0.0
  %612 = vmatpush1.msra.mxu0 0.0
  %613 = vmatprep.subr.mxu0 0.0
  %614 = vmatpush1.msra.mxu0 0.0
  %615 = vmatprep.subr.mxu0 0.0
  %616 = vmatpush1.msra.mxu0 0.0
  %617 = vmatprep.subr.mxu0 0.0
  %618 = vmatpush1.msra.mxu0 0.0
  %619 = vmatprep.mubr.f32.mxu0 0.0
  %620 = vmatmul.mubr.f32.gmra.mrb[0].mxu0 %v553
  %v621 = vpop.f32.mrb[0].mxu0
  %v622 = vadd.f32 0.0, %v621
  %v623 = vpop.f32.mrb[0].mxu0
  %624 = vdwg.mxu0
  %v625 = vadd.f32 %v140, %v622
  %v626 = vmul.f32 %v625, 0.5
  %v627 = vtanh.pop %v626
  %v628 = vmul.f32 %v627, 0.5
  %v629 = vadd.f32 %v628, 0.5
  %v630 = vtanh.pop %v625
  %v631 = vmul.f32 %v629, %v543
  %633 = vrot.lane.b32.xlu0 %v630, 32
  %v634 = vpop.permute.xlu0 %633
  %v636 = vmul.f32 %v629, %v634
  %638 = vrot.lane.b32.xlu0 %v636, 32
  %v639 = vpop.permute.xlu0 %638
  %v641 = vadd.f32 %v631, %v639
  %v642 = vtanh.pop %v641
  %644 = vrot.lane.b32.xlu0 %v642, 32
  %v645 = vpop.permute.xlu0 %644
  %v647 = vmul.f32 %v629, %v645
  %649 = vrot.lane.b32.xlu0 %v647, 64
  %v650 = vpop.permute.xlu0 %649
  %v651 = vsel %vm159, %v650, 0
  %653 = vmatprep.subr.mxu0 0.0
  %654 = vmatpush1.msra.mxu0 %v24
  %655 = vmatprep.subr.mxu0 0.0
  %656 = vmatpush1.msra.mxu0 %v25
  %657 = vmatprep.subr.mxu0 0.0
  %658 = vmatpush1.msra.mxu0 %v26
  %659 = vmatprep.subr.mxu0 0.0
  %660 = vmatpush1.msra.mxu0 %v27
  %661 = vmatprep.subr.mxu0 0.0
  %662 = vmatpush1.msra.mxu0 0.0
  %663 = vmatprep.subr.mxu0 0.0
  %664 = vmatpush1.msra.mxu0 0.0
  %665 = vmatprep.subr.mxu0 0.0
  %666 = vmatpush1.msra.mxu0 0.0
  %667 = vmatprep.subr.mxu0 0.0
  %668 = vmatpush1.msra.mxu0 0.0
  %669 = vmatprep.subr.mxu0 0.0
  %670 = vmatpush1.msra.mxu0 0.0
  %671 = vmatprep.subr.mxu0 0.0
  %672 = vmatpush1.msra.mxu0 0.0
  %673 = vmatprep.subr.mxu0 0.0
  %674 = vmatpush1.msra.mxu0 0.0
  %675 = vmatprep.subr.mxu0 0.0
  %676 = vmatpush1.msra.mxu0 0.0
  %677 = vmatprep.subr.mxu0 0.0
  %678 = vmatpush1.msra.mxu0 0.0
  %679 = vmatprep.subr.mxu0 0.0
  %680 = vmatpush1.msra.mxu0 0.0
  %681 = vmatprep.subr.mxu0 0.0
  %682 = vmatpush1.msra.mxu0 0.0
  %683 = vmatprep.subr.mxu0 0.0
  %684 = vmatpush1.msra.mxu0 0.0
  %685 = vmatprep.subr.mxu0 0.0
  %686 = vmatpush1.msra.mxu0 0.0
  %687 = vmatprep.subr.mxu0 0.0
  %688 = vmatpush1.msra.mxu0 0.0
  %689 = vmatprep.subr.mxu0 0.0
  %690 = vmatpush1.msra.mxu0 0.0
  %691 = vmatprep.subr.mxu0 0.0
  %692 = vmatpush1.msra.mxu0 0.0
  %693 = vmatprep.subr.mxu0 0.0
  %694 = vmatpush1.msra.mxu0 0.0
  %695 = vmatprep.subr.mxu0 0.0
  %696 = vmatpush1.msra.mxu0 0.0
  %697 = vmatprep.subr.mxu0 0.0
  %698 = vmatpush1.msra.mxu0 0.0
  %699 = vmatprep.subr.mxu0 0.0
  %700 = vmatpush1.msra.mxu0 0.0
  %701 = vmatprep.subr.mxu0 0.0
  %702 = vmatpush1.msra.mxu0 0.0
  %703 = vmatprep.subr.mxu0 0.0
  %704 = vmatpush1.msra.mxu0 0.0
  %705 = vmatprep.subr.mxu0 0.0
  %706 = vmatpush1.msra.mxu0 0.0
  %707 = vmatprep.subr.mxu0 0.0
  %708 = vmatpush1.msra.mxu0 0.0
  %709 = vmatprep.subr.mxu0 0.0
  %710 = vmatpush1.msra.mxu0 0.0
  %711 = vmatprep.subr.mxu0 0.0
  %712 = vmatpush1.msra.mxu0 0.0
  %713 = vmatprep.subr.mxu0 0.0
  %714 = vmatpush1.msra.mxu0 0.0
  %715 = vmatprep.subr.mxu0 0.0
  %716 = vmatpush1.msra.mxu0 0.0
  %717 = vmatprep.mubr.f32.mxu0 0.0
  %718 = vmatmul.mubr.f32.gmra.mrb[0].mxu0 %v651
  %v719 = vpop.f32.mrb[0].mxu0
  %v720 = vadd.f32 0.0, %v719
  %v721 = vpop.f32.mrb[0].mxu0
  %722 = vdwg.mxu0
  %v723 = vadd.f32 %v145, %v720
  %v724 = vmul.f32 %v723, 0.5
  %v725 = vtanh.pop %v724
  %v726 = vmul.f32 %v725, 0.5
  %v727 = vadd.f32 %v726, 0.5
  %v728 = vtanh.pop %v723
  %v729 = vmul.f32 %v727, %v641
  %731 = vrot.lane.b32.xlu0 %v728, 32
  %v732 = vpop.permute.xlu0 %731
  %v734 = vmul.f32 %v727, %v732
  %736 = vrot.lane.b32.xlu0 %v734, 32
  %v737 = vpop.permute.xlu0 %736
  %v739 = vadd.f32 %v729, %v737
  %v740 = vtanh.pop %v739
  %742 = vrot.lane.b32.xlu0 %v740, 32
  %v743 = vpop.permute.xlu0 %742
  %v745 = vmul.f32 %v727, %v743
  %747 = vrot.lane.b32.xlu0 %v745, 64
  %v748 = vpop.permute.xlu0 %747
  %v749 = vsel %vm159, %v748, 0
  %751 = vmatprep.subr.mxu0 0.0
  %752 = vmatpush1.msra.mxu0 %v24
  %753 = vmatprep.subr.mxu0 0.0
  %754 = vmatpush1.msra.mxu0 %v25
  %755 = vmatprep.subr.mxu0 0.0
  %756 = vmatpush1.msra.mxu0 %v26
  %757 = vmatprep.subr.mxu0 0.0
  %758 = vmatpush1.msra.mxu0 %v27
  %759 = vmatprep.subr.mxu0 0.0
  %760 = vmatpush1.msra.mxu0 0.0
  %761 = vmatprep.subr.mxu0 0.0
  %762 = vmatpush1.msra.mxu0 0.0
  %763 = vmatprep.subr.mxu0 0.0
  %764 = vmatpush1.msra.mxu0 0.0
  %765 = vmatprep.subr.mxu0 0.0
  %766 = vmatpush1.msra.mxu0 0.0
  %767 = vmatprep.subr.mxu0 0.0
  %768 = vmatpush1.msra.mxu0 0.0
  %769 = vmatprep.subr.mxu0 0.0
  %770 = vmatpush1.msra.mxu0 0.0
  %771 = vmatprep.subr.mxu0 0.0
  %772 = vmatpush1.msra.mxu0 0.0
  %773 = vmatprep.subr.mxu0 0.0
  %774 = vmatpush1.msra.mxu0 0.0
  %775 = vmatprep.subr.mxu0 0.0
  %776 = vmatpush1.msra.mxu0 0.0
  %777 = vmatprep.subr.mxu0 0.0
  %778 = vmatpush1.msra.mxu0 0.0
  %779 = vmatprep.subr.mxu0 0.0
  %780 = vmatpush1.msra.mxu0 0.0
  %781 = vmatprep.subr.mxu0 0.0
  %782 = vmatpush1.msra.mxu0 0.0
  %783 = vmatprep.subr.mxu0 0.0
  %784 = vmatpush1.msra.mxu0 0.0
  %785 = vmatprep.subr.mxu0 0.0
  %786 = vmatpush1.msra.mxu0 0.0
  %787 = vmatprep.subr.mxu0 0.0
  %788 = vmatpush1.msra.mxu0 0.0
  %789 = vmatprep.subr.mxu0 0.0
  %790 = vmatpush1.msra.mxu0 0.0
  %791 = vmatprep.subr.mxu0 0.0
  %792 = vmatpush1.msra.mxu0 0.0
  %793 = vmatprep.subr.mxu0 0.0
  %794 = vmatpush1.msra.mxu0 0.0
  %795 = vmatprep.subr.mxu0 0.0
  %796 = vmatpush1.msra.mxu0 0.0
  %797 = vmatprep.subr.mxu0 0.0
  %798 = vmatpush1.msra.mxu0 0.0
  %799 = vmatprep.subr.mxu0 0.0
  %800 = vmatpush1.msra.mxu0 0.0
  %801 = vmatprep.subr.mxu0 0.0
  %802 = vmatpush1.msra.mxu0 0.0
  %803 = vmatprep.subr.mxu0 0.0
  %804 = vmatpush1.msra.mxu0 0.0
  %805 = vmatprep.subr.mxu0 0.0
  %806 = vmatpush1.msra.mxu0 0.0
  %807 = vmatprep.subr.mxu0 0.0
  %808 = vmatpush1.msra.mxu0 0.0
  %809 = vmatprep.subr.mxu0 0.0
  %810 = vmatpush1.msra.mxu0 0.0
  %811 = vmatprep.subr.mxu0 0.0
  %812 = vmatpush1.msra.mxu0 0.0
  %813 = vmatprep.subr.mxu0 0.0
  %814 = vmatpush1.msra.mxu0 0.0
  %815 = vmatprep.mubr.f32.mxu0 0.0
  %816 = vmatmul.mubr.f32.gmra.mrb[0].mxu0 %v749
  %v817 = vpop.f32.mrb[0].mxu0
  %v818 = vadd.f32 0.0, %v817
  %v819 = vpop.f32.mrb[0].mxu0
  %820 = vdwg.mxu0
  %v821 = vadd.f32 %v150, %v818
  %v822 = vmul.f32 %v821, 0.5
  %v823 = vtanh.pop %v822
  %v824 = vmul.f32 %v823, 0.5
  %v825 = vadd.f32 %v824, 0.5
  %v826 = vtanh.pop %v821
  %v827 = vmul.f32 %v825, %v739
  %829 = vrot.lane.b32.xlu0 %v826, 32
  %v830 = vpop.permute.xlu0 %829
  %v832 = vmul.f32 %v825, %v830
  %834 = vrot.lane.b32.xlu0 %v832, 32
  %v835 = vpop.permute.xlu0 %834
  %v837 = vadd.f32 %v827, %v835
  %v838 = vtanh.pop %v837
  %840 = vrot.lane.b32.xlu0 %v838, 32
  %v841 = vpop.permute.xlu0 %840
  %v843 = vmul.f32 %v825, %v841
  %845 = vrot.lane.b32.xlu0 %v843, 64
  %v846 = vpop.permute.xlu0 %845
  %v847 = vsel %vm159, %v846, 0
  %849 = vmatprep.subr.mxu0 0.0
  %850 = vmatpush1.msra.mxu0 %v24
  %851 = vmatprep.subr.mxu0 0.0
  %852 = vmatpush1.msra.mxu0 %v25
  %853 = vmatprep.subr.mxu0 0.0
  %854 = vmatpush1.msra.mxu0 %v26
  %855 = vmatprep.subr.mxu0 0.0
  %856 = vmatpush1.msra.mxu0 %v27
  %857 = vmatprep.subr.mxu0 0.0
  %858 = vmatpush1.msra.mxu0 0.0
  %859 = vmatprep.subr.mxu0 0.0
  %860 = vmatpush1.msra.mxu0 0.0
  %861 = vmatprep.subr.mxu0 0.0
  %862 = vmatpush1.msra.mxu0 0.0
  %863 = vmatprep.subr.mxu0 0.0
  %864 = vmatpush1.msra.mxu0 0.0
  %865 = vmatprep.subr.mxu0 0.0
  %866 = vmatpush1.msra.mxu0 0.0
  %867 = vmatprep.subr.mxu0 0.0
  %868 = vmatpush1.msra.mxu0 0.0
  %869 = vmatprep.subr.mxu0 0.0
  %870 = vmatpush1.msra.mxu0 0.0
  %871 = vmatprep.subr.mxu0 0.0
  %872 = vmatpush1.msra.mxu0 0.0
  %873 = vmatprep.subr.mxu0 0.0
  %874 = vmatpush1.msra.mxu0 0.0
  %875 = vmatprep.subr.mxu0 0.0
  %876 = vmatpush1.msra.mxu0 0.0
  %877 = vmatprep.subr.mxu0 0.0
  %878 = vmatpush1.msra.mxu0 0.0
  %879 = vmatprep.subr.mxu0 0.0
  %880 = vmatpush1.msra.mxu0 0.0
  %881 = vmatprep.subr.mxu0 0.0
  %882 = vmatpush1.msra.mxu0 0.0
  %883 = vmatprep.subr.mxu0 0.0
  %884 = vmatpush1.msra.mxu0 0.0
  %885 = vmatprep.subr.mxu0 0.0
  %886 = vmatpush1.msra.mxu0 0.0
  %887 = vmatprep.subr.mxu0 0.0
  %888 = vmatpush1.msra.mxu0 0.0
  %889 = vmatprep.subr.mxu0 0.0
  %890 = vmatpush1.msra.mxu0 0.0
  %891 = vmatprep.subr.mxu0 0.0
  %892 = vmatpush1.msra.mxu0 0.0
  %893 = vmatprep.subr.mxu0 0.0
  %894 = vmatpush1.msra.mxu0 0.0
  %895 = vmatprep.subr.mxu0 0.0
  %896 = vmatpush1.msra.mxu0 0.0
  %897 = vmatprep.subr.mxu0 0.0
  %898 = vmatpush1.msra.mxu0 0.0
  %899 = vmatprep.subr.mxu0 0.0
  %900 = vmatpush1.msra.mxu0 0.0
  %901 = vmatprep.subr.mxu0 0.0
  %902 = vmatpush1.msra.mxu0 0.0
  %903 = vmatprep.subr.mxu0 0.0
  %904 = vmatpush1.msra.mxu0 0.0
  %905 = vmatprep.subr.mxu0 0.0
  %906 = vmatpush1.msra.mxu0 0.0
  %907 = vmatprep.subr.mxu0 0.0
  %908 = vmatpush1.msra.mxu0 0.0
  %909 = vmatprep.subr.mxu0 0.0
  %910 = vmatpush1.msra.mxu0 0.0
  %911 = vmatprep.subr.mxu0 0.0
  %912 = vmatpush1.msra.mxu0 0.0
  %913 = vmatprep.mubr.f32.mxu0 0.0
  %914 = vmatmul.mubr.f32.gmra.mrb[0].mxu0 %v847
  %v915 = vpop.f32.mrb[0].mxu0
  %v916 = vadd.f32 0.0, %v915
  %v917 = vpop.f32.mrb[0].mxu0
  %918 = vdwg.mxu0
  %v919 = vadd.f32 %v155, %v916
  %v920 = vmul.f32 %v919, 0.5
  %v921 = vtanh.pop %v920
  %v922 = vmul.f32 %v921, 0.5
  %v923 = vadd.f32 %v922, 0.5
  %v924 = vtanh.pop %v919
  %v925 = vmul.f32 %v923, %v837
  %927 = vrot.lane.b32.xlu0 %v924, 32
  %v928 = vpop.permute.xlu0 %927
  %v930 = vmul.f32 %v923, %v928
  %932 = vrot.lane.b32.xlu0 %v930, 32
  %v933 = vpop.permute.xlu0 %932
  %v935 = vadd.f32 %v925, %v933
  %v936 = vtanh.pop %v935
  %938 = vrot.lane.b32.xlu0 %v936, 32
  %v939 = vpop.permute.xlu0 %938
  %v941 = vmul.f32 %v923, %v939
  %v942 = vmul.f32 %v157, 0.5
  %v943 = vtanh.pop %v942
  %v944 = vmul.f32 %v943, 0.5
  %v945 = vadd.f32 %v944, 0.5
  %v946 = vtanh.pop %v157
  %948 = vrot.lane.b32.xlu0 %v946, 32
  %v949 = vpop.permute.xlu0 %948
  %v951 = vmul.f32 %v945, %v949
  %v952 = vtanh.pop %v951
  %954 = vrot.lane.b32.xlu0 %v952, 64
  %v955 = vpop.permute.xlu0 %954
  %v957 = vmul.f32 %v945, %v955
  %v958 = vld [vmem:[%s2] sm:$0xff]
  %v959 = vld [vmem:[%s2 + $0x8] sm:$0xff]
  %v960 = vld [vmem:[%s2 + $0x10] sm:$0xff]
  %v961 = vld [vmem:[%s2 + $0x18] sm:$0xff]
  %v962 = vld [vmem:[%s2 + $0x20] sm:$0xff]
  %v963 = vld [vmem:[%s2 + $0x28] sm:$0xff]
  %v964 = vld [vmem:[%s2 + $0x30] sm:$0xff]
  %v965 = vld [vmem:[%s2 + $0x38] sm:$0xff]
  %v966 = vld [vmem:[%s2 + $0x40] sm:$0x1]
  %968 = vrot.lane.b32.xlu0 %v957, 64
  %v969 = vpop.permute.xlu0 %968
  %v970 = vsel %vm159, %v969, 0
  %972 = vmatprep.subr.mxu0 0.0
  %973 = vmatpush1.msra.mxu0 %v962
  %974 = vmatprep.subr.mxu0 0.0
  %975 = vmatpush1.msra.mxu0 %v963
  %976 = vmatprep.subr.mxu0 0.0
  %977 = vmatpush1.msra.mxu0 %v964
  %978 = vmatprep.subr.mxu0 0.0
  %979 = vmatpush1.msra.mxu0 %v965
  %980 = vmatprep.subr.mxu0 0.0
  %981 = vmatpush1.msra.mxu0 0.0
  %982 = vmatprep.subr.mxu0 0.0
  %983 = vmatpush1.msra.mxu0 0.0
  %984 = vmatprep.subr.mxu0 0.0
  %985 = vmatpush1.msra.mxu0 0.0
  %986 = vmatprep.subr.mxu0 0.0
  %987 = vmatpush1.msra.mxu0 0.0
  %988 = vmatprep.subr.mxu0 0.0
  %989 = vmatpush1.msra.mxu0 0.0
  %990 = vmatprep.subr.mxu0 0.0
  %991 = vmatpush1.msra.mxu0 0.0
  %992 = vmatprep.subr.mxu0 0.0
  %993 = vmatpush1.msra.mxu0 0.0
  %994 = vmatprep.subr.mxu0 0.0
  %995 = vmatpush1.msra.mxu0 0.0
  %996 = vmatprep.subr.mxu0 0.0
  %997 = vmatpush1.msra.mxu0 0.0
  %998 = vmatprep.subr.mxu0 0.0
  %999 = vmatpush1.msra.mxu0 0.0
  %1000 = vmatprep.subr.mxu0 0.0
  %1001 = vmatpush1.msra.mxu0 0.0
  %1002 = vmatprep.subr.mxu0 0.0
  %1003 = vmatpush1.msra.mxu0 0.0
  %1004 = vmatprep.subr.mxu0 0.0
  %1005 = vmatpush1.msra.mxu0 0.0
  %1006 = vmatprep.subr.mxu0 0.0
  %1007 = vmatpush1.msra.mxu0 0.0
  %1008 = vmatprep.subr.mxu0 0.0
  %1009 = vmatpush1.msra.mxu0 0.0
  %1010 = vmatprep.subr.mxu0 0.0
  %1011 = vmatpush1.msra.mxu0 0.0
  %1012 = vmatprep.subr.mxu0 0.0
  %1013 = vmatpush1.msra.mxu0 0.0
  %1014 = vmatprep.subr.mxu0 0.0
  %1015 = vmatpush1.msra.mxu0 0.0
  %1016 = vmatprep.subr.mxu0 0.0
  %1017 = vmatpush1.msra.mxu0 0.0
  %1018 = vmatprep.subr.mxu0 0.0
  %1019 = vmatpush1.msra.mxu0 0.0
  %1020 = vmatprep.subr.mxu0 0.0
  %1021 = vmatpush1.msra.mxu0 0.0
  %1022 = vmatprep.subr.mxu0 0.0
  %1023 = vmatpush1.msra.mxu0 0.0
  %1024 = vmatprep.subr.mxu0 0.0
  %1025 = vmatpush1.msra.mxu0 0.0
  %1026 = vmatprep.subr.mxu0 0.0
  %1027 = vmatpush1.msra.mxu0 0.0
  %1028 = vmatprep.subr.mxu0 0.0
  %1029 = vmatpush1.msra.mxu0 0.0
  %1030 = vmatprep.subr.mxu0 0.0
  %1031 = vmatpush1.msra.mxu0 0.0
  %1032 = vmatprep.subr.mxu0 0.0
  %1033 = vmatpush1.msra.mxu0 0.0
  %1034 = vmatprep.subr.mxu0 0.0
  %1035 = vmatpush1.msra.mxu0 0.0
  %1036 = vmatprep.mubr.f32.mxu0 0.0
  %1037 = vmatmul.mubr.f32.gmra.mrb[0].mxu0 %v970
  %v1038 = vpop.f32.mrb[0].mxu0
  %v1039 = vadd.f32 0.0, %v1038
  %v1040 = vpop.f32.mrb[0].mxu0
  %1041 = vdwg.mxu0
  %1043 = vrot.lane.b32.xlu0 %v941, 64
  %v1044 = vpop.permute.xlu0 %1043
  %v1045 = vsel %vm159, %v1044, 0
  %1047 = vmatprep.subr.mxu0 0.0
  %1048 = vmatpush1.msra.mxu0 %v958
  %1049 = vmatprep.subr.mxu0 0.0
  %1050 = vmatpush1.msra.mxu0 %v959
  %1051 = vmatprep.subr.mxu0 0.0
  %1052 = vmatpush1.msra.mxu0 %v960
  %1053 = vmatprep.subr.mxu0 0.0
  %1054 = vmatpush1.msra.mxu0 %v961
  %1055 = vmatprep.subr.mxu0 0.0
  %1056 = vmatpush1.msra.mxu0 0.0
  %1057 = vmatprep.subr.mxu0 0.0
  %1058 = vmatpush1.msra.mxu0 0.0
  %1059 = vmatprep.subr.mxu0 0.0
  %1060 = vmatpush1.msra.mxu0 0.0
  %1061 = vmatprep.subr.mxu0 0.0
  %1062 = vmatpush1.msra.mxu0 0.0
  %1063 = vmatprep.subr.mxu0 0.0
  %1064 = vmatpush1.msra.mxu0 0.0
  %1065 = vmatprep.subr.mxu0 0.0
  %1066 = vmatpush1.msra.mxu0 0.0
  %1067 = vmatprep.subr.mxu0 0.0
  %1068 = vmatpush1.msra.mxu0 0.0
  %1069 = vmatprep.subr.mxu0 0.0
  %1070 = vmatpush1.msra.mxu0 0.0
  %1071 = vmatprep.subr.mxu0 0.0
  %1072 = vmatpush1.msra.mxu0 0.0
  %1073 = vmatprep.subr.mxu0 0.0
  %1074 = vmatpush1.msra.mxu0 0.0
  %1075 = vmatprep.subr.mxu0 0.0
  %1076 = vmatpush1.msra.mxu0 0.0
  %1077 = vmatprep.subr.mxu0 0.0
  %1078 = vmatpush1.msra.mxu0 0.0
  %1079 = vmatprep.subr.mxu0 0.0
  %1080 = vmatpush1.msra.mxu0 0.0
  %1081 = vmatprep.subr.mxu0 0.0
  %1082 = vmatpush1.msra.mxu0 0.0
  %1083 = vmatprep.subr.mxu0 0.0
  %1084 = vmatpush1.msra.mxu0 0.0
  %1085 = vmatprep.subr.mxu0 0.0
  %1086 = vmatpush1.msra.mxu0 0.0
  %1087 = vmatprep.subr.mxu0 0.0
  %1088 = vmatpush1.msra.mxu0 0.0
  %1089 = vmatprep.subr.mxu0 0.0
  %1090 = vmatpush1.msra.mxu0 0.0
  %1091 = vmatprep.subr.mxu0 0.0
  %1092 = vmatpush1.msra.mxu0 0.0
  %1093 = vmatprep.subr.mxu0 0.0
  %1094 = vmatpush1.msra.mxu0 0.0
  %1095 = vmatprep.subr.mxu0 0.0
  %1096 = vmatpush1.msra.mxu0 0.0
  %1097 = vmatprep.subr.mxu0 0.0
  %1098 = vmatpush1.msra.mxu0 0.0
  %1099 = vmatprep.subr.mxu0 0.0
  %1100 = vmatpush1.msra.mxu0 0.0
  %1101 = vmatprep.subr.mxu0 0.0
  %1102 = vmatpush1.msra.mxu0 0.0
  %1103 = vmatprep.subr.mxu0 0.0
  %1104 = vmatpush1.msra.mxu0 0.0
  %1105 = vmatprep.subr.mxu0 0.0
  %1106 = vmatpush1.msra.mxu0 0.0
  %1107 = vmatprep.subr.mxu0 0.0
  %1108 = vmatpush1.msra.mxu0 0.0
  %1109 = vmatprep.subr.mxu0 0.0
  %1110 = vmatpush1.msra.mxu0 0.0
  %1111 = vmatprep.mubr.f32.mxu0 0.0
  %1112 = vmatmul.mubr.f32.gmra.mrb[0].mxu0 %v1045
  %v1113 = vpop.f32.mrb[0].mxu0
  %v1114 = vadd.f32 %v1039, %v1113
  %v1115 = vpop.f32.mrb[0].mxu0
  %1116 = vdwg.mxu0
  %v1117 = vlaneseq
  %v1118 = vshrl.u32 %v1117, 7
  %v1119 = vsub.s32 0, %v1118
  %v1120 = vrot.slane %v966, %v1119
  %v1121 = vadd.f32 %v1114, %v1120
  %vm1122 = vcmask 15360
  %1123 = vst.msk [vmem:[%s3] sm:$0xff] %vm1122, %v1121
  // Predicated region
  $region14: #{tpu_custom_call.1} parent=0 // pred_check
    _
  $region15: #{tpu_custom_call.1} parent=0 // pred_check_branch
    %1125 = sbr.rel (0) target = $region17
  $region16: #{tpu_custom_call.1} parent=0 // pred_region
    _
  $region17: #{tpu_custom_call.1} parent=0 // pred_fallthru
    _
  // Predicated region
  $region18: #{tpu_custom_call.1} parent=0 // pred_check
    _
  $region19: #{tpu_custom_call.1} parent=0 // pred_check_branch
    %1127 = sbr.rel (0) target = $region21
  $region20: #{tpu_custom_call.1} parent=0 // pred_region
    _
  $region21: #{tpu_custom_call.1} parent=0 // pred_fallthru
    _

</llo_original>
